<compile_context>
chip_gen: v7x
topology: tpu7x:2x2x1
jax: 0.10.0
libtpu: 0.0.40
codegen_flags: <defaults>
</compile_context>

<pallas_src>
import functools

import jax
import jax.numpy as jnp
import numpy as np
from jax import lax
from jax.experimental import pallas as pl
from jax.experimental.pallas import tpu as pltpu

# ----------------------------------------------------------------------------
# MultiLoss config (deterministic, in-script): two losses, as if constructed
#   losses = [{'loss_fn': MSE, 'weight': 0.7}, {'loss_fn': L1, 'weight': 0.3}]
#   num_pool = 3
# ----------------------------------------------------------------------------
W_MSE = 0.7
W_L1 = 0.3
NUM_POOL = 3

LANES = 128
SUBLANES = 8
# 2048 rows x 128 lanes x 4 B = 1 MiB per pipeline buffer.
# 2 inputs x 2 buffers + 2 accumulators ~ 6 MiB  -> fits v5e's 16 MiB scoped
# VMEM default and v7x's 64 MiB physical VMEM with plenty of headroom.
MAX_TILE_ROWS = 2048
NUM_CORE_SPLITS = 2  # leading "parallel" axis: uses both TCs on v7x, no-op on v5e/v6e


def _make_ds_weights(num_pool: int) -> np.ndarray:
    ds = np.array([1.0 / 2 ** i for i in range(num_pool)])
    mask = np.array([i < num_pool - 1 for i in range(num_pool)])
    ds[~mask] = 0.0
    ds = ds / ds.sum()
    return ds


DS_WEIGHTS = _make_ds_weights(NUM_POOL)


# ----------------------------------------------------------------------------
# Pallas kernel: tiled reduction of squared / absolute error with elementwise
# (vector-shaped) accumulation; fused weighted combine on the final step of
# the reduction axis. Grid = (core_split, block) with ("parallel","arbitrary").
# ----------------------------------------------------------------------------
def _multiloss_kernel(x_ref, y_ref, out_ref, acc_sq, acc_abs, *,
                      w_mse, w_l1, inv_n, rows, tile_rows, inner_blocks,
                      needs_mask):
    s = pl.program_id(0)          # core-split index (parallel)
    i = pl.program_id(1)          # block index within this split (arbitrary)

    @pl.when(i == 0)
    def _():
        acc_sq[...] = jnp.zeros_like(acc_sq)
        acc_abs[...] = jnp.zeros_like(acc_abs)

    d = x_ref[...].astype(jnp.float32) - y_ref[...].astype(jnp.float32)
    sq = d * d
    ab = jnp.abs(d)

    if needs_mask:
        # Mask rows past the true row count (ragged last block and/or the
        # clamped duplicate block of the last core split).
        blk = s * inner_blocks + i
        row_idx = blk * tile_rows + lax.broadcasted_iota(jnp.int32, sq.shape, 0)
        valid = row_idx < rows
        sq = jnp.where(valid, sq, 0.0)
        ab = jnp.where(valid, ab, 0.0)

    # Pure-VPU elementwise accumulation (hidden under the input DMAs).
    acc_sq[...] = acc_sq[...] + sq
    acc_abs[...] = acc_abs[...] + ab

    @pl.when(i == pl.num_programs(1) - 1)
    def _():
        sse = jnp.sum(acc_sq[...], keepdims=True)    # (1, 1) -- single XLU reduce
        sae = jnp.sum(acc_abs[...], keepdims=True)   # (1, 1)
        out_ref[...] = (w_mse * inv_n) * sse + (w_l1 * inv_n) * sae


def _to_slab(x: jax.Array) -> jax.Array:
    """Flatten to a lane-dense (rows, 128) slab, avoiding copies when possible."""
    flat = x.reshape(-1)
    n = flat.shape[0]
    if n % LANES == 0:
        return flat.reshape(-1, LANES)       # free reshape, no extra HBM traffic
    # TODO(synk): ragged element counts (n % 128 != 0) still pay one pad copy.
    pad = (-n) % LANES
    flat = jnp.concatenate([flat, jnp.zeros((pad,), flat.dtype)])
    return flat.reshape(-1, LANES)


def multiloss_single(inp: jax.Array, gt: jax.Array) -> jax.Array:
    """Pallas equivalent of MultiLoss._forward(inp, gt) for one tensor pair."""
    assert inp.shape == gt.shape
    n_true = int(np.prod(inp.shape))

    x2 = _to_slab(inp)
    y2 = _to_slab(gt)
    rows = x2.shape[0]

    # Tile sizing: a single full-height block for small inputs (block dims may
    # equal the full array dims), otherwise MAX_TILE_ROWS (multiple of 8).
    if rows <= MAX_TILE_ROWS:
        tile_rows = rows
    else:
        tile_rows = MAX_TILE_ROWS

    num_blocks = -(-rows // tile_rows)
    splits = NUM_CORE_SPLITS if num_blocks >= NUM_CORE_SPLITS else 1
    inner_blocks = -(-num_blocks // splits)
    needs_mask = (rows % tile_rows != 0) or (splits * inner_blocks != num_blocks)

    kernel = functools.partial(
        _multiloss_kernel,
        w_mse=float(W_MSE),
        w_l1=float(W_L1),
        inv_n=1.0 / float(n_true),
        rows=rows,
        tile_rows=tile_rows,
        inner_blocks=inner_blocks,
        needs_mask=needs_mask,
    )

    # Clamp the block index so the (possibly) over-provisioned last split never
    # DMAs from a block index past the array; its contribution is masked to 0.
    def in_map(s, i):
        return (jnp.minimum(s * inner_blocks + i, num_blocks - 1), 0)

    partial_out = pl.pallas_call(
        kernel,
        out_shape=jax.ShapeDtypeStruct((splits, 1), jnp.float32),
        grid_spec=pltpu.PrefetchScalarGridSpec(
            num_scalar_prefetch=0,
            grid=(splits, inner_blocks),
            in_specs=[
                pl.BlockSpec((tile_rows, LANES), in_map),
                pl.BlockSpec((tile_rows, LANES), in_map),
            ],
            out_specs=pl.BlockSpec((1, 1), lambda s, i: (s, 0)),
            scratch_shapes=[
                pltpu.VMEM((tile_rows, LANES), jnp.float32),
                pltpu.VMEM((tile_rows, LANES), jnp.float32),
            ],
        ),
        compiler_params=pltpu.CompilerParams(
            dimension_semantics=("parallel", "arbitrary"),
        ),
    )(x2, y2)

    # Each split's partial weighted loss is linear in SSE/SAE -> just sum.
    return jnp.sum(partial_out)


def multiloss_forward(inp, gt):
    """Mirror of MultiLoss.forward: tensor pair OR list (deep supervision)."""
    if isinstance(inp, (tuple, list)) and isinstance(gt, (tuple, list)):
        total = jnp.float32(0.0)
        for i, (x, y) in enumerate(zip(inp, gt)):
            w = float(DS_WEIGHTS[i])
            if w == 0.0:
                # Zero ds-weight (last scale by construction): contributes
                # exactly 0 to the stacked mean -> skip the launch entirely.
                continue
            total = total + multiloss_single(x, y) * w
        return total / jnp.float32(len(inp))   # mean over all scales (incl. zero-weighted)
    else:
        return multiloss_single(inp, gt)


# ----------------------------------------------------------------------------
# Pure-JAX reference for correctness checking.
# ----------------------------------------------------------------------------
def _ref_single(x, y):
    x = x.astype(jnp.float32)
    y = y.astype(jnp.float32)
    return W_MSE * jnp.mean((x - y) ** 2) + W_L1 * jnp.mean(jnp.abs(x - y))


def _ref_forward(inp, gt):
    if isinstance(inp, (tuple, list)):
        vals = [_ref_single(x, y) * jnp.float32(DS_WEIGHTS[i])
                for i, (x, y) in enumerate(zip(inp, gt))]
        return jnp.stack(vals, 0).mean(0)
    return _ref_single(inp, gt)


if __name__ == "__main__":
    key = jax.random.PRNGKey(0)

    # Single-tensor path: NCHW (2, 4, 16, 16)
    k1, k2, key = jax.random.split(key, 3)
    inp = jax.random.normal(k1, (2, 4, 16, 16), jnp.float32)
    gt = jax.random.normal(k2, (2, 4, 16, 16), jnp.float32)

    loss_single = jax.block_until_ready(multiloss_forward(inp, gt))
    ref_single = _ref_forward(inp, gt)
    np.testing.assert_allclose(np.asarray(loss_single), np.asarray(ref_single),
                               rtol=1e-5, atol=1e-5)

    # Deep-supervision path: NUM_POOL scales (halving spatial dims).
    inp_list, gt_list = [], []
    for i in range(NUM_POOL):
        ka, kb, key = jax.random.split(key, 3)
        s = 16 >> i
        inp_list.append(jax.random.normal(ka, (2, 4, s, s), jnp.float32))
        gt_list.append(jax.random.normal(kb, (2, 4, s, s), jnp.float32))

    loss_ds = jax.block_until_ready(multiloss_forward(inp_list, gt_list))
    ref_ds = _ref_forward(inp_list, gt_list)
    np.testing.assert_allclose(np.asarray(loss_ds), np.asarray(ref_ds),
                               rtol=1e-5, atol=1e-5)

    print("KERNEL_OK")
</pallas_src>

<mosaic_0001>
module attributes {stable_mosaic.version = 11 : i64} {
  func.func @_multiloss_kernel(%arg0: i32, %arg1: i32, %arg2: memref<16x128xf32, #tpu.memory_space<vmem>>, %arg3: memref<16x128xf32, #tpu.memory_space<vmem>>, %arg4: memref<1x1xf32, #tpu.memory_space<vmem>>, %arg5: memref<16x128xf32, #tpu.memory_space<vmem>>, %arg6: memref<16x128xf32, #tpu.memory_space<vmem>>) attributes {dimension_semantics = [#tpu.dimension_semantics<parallel>, #tpu.dimension_semantics<arbitrary>], iteration_bounds = array<i64: 1, 1>, scalar_prefetch = 0 : i64, scratch_operands = 2 : i64, tpu.core_type = #tpu.core_type<tc>, window_params = [{transform_indices = @transform_0, window_bounds = array<i64: 16, 128>}, {transform_indices = @transform_1, window_bounds = array<i64: 16, 128>}, {transform_indices = @transform_2, window_bounds = array<i64: 1, 1>}]} {
    %c0_i32 = arith.constant 0 : i32
    %0 = arith.cmpi eq, %arg1, %c0_i32 : i32
    %1 = arith.extui %0 : i1 to i32
    %c0_i32_0 = arith.constant 0 : i32
    %2 = arith.cmpi ne, %1, %c0_i32_0 : i32
    scf.if %2 {
      %cst = arith.constant 0.000000e+00 : f32
      %17 = vector.broadcast %cst : f32 to vector<16x128xf32>
      %c0_14 = arith.constant 0 : index
      %c0_15 = arith.constant 0 : index
      %18 = vector.load %arg5[%c0_14, %c0_15] : memref<16x128xf32, #tpu.memory_space<vmem>>, vector<16x128xf32>
      tpu.vector_store %arg5[%c0_14, %c0_15], %17 {strides = array<i32>} : memref<16x128xf32, #tpu.memory_space<vmem>>, vector<16x128xf32>,
      %cst_16 = arith.constant 0.000000e+00 : f32
      %19 = vector.broadcast %cst_16 : f32 to vector<16x128xf32>
      %c0_17 = arith.constant 0 : index
      %c0_18 = arith.constant 0 : index
      %20 = vector.load %arg6[%c0_17, %c0_18] : memref<16x128xf32, #tpu.memory_space<vmem>>, vector<16x128xf32>
      tpu.vector_store %arg6[%c0_17, %c0_18], %19 {strides = array<i32>} : memref<16x128xf32, #tpu.memory_space<vmem>>, vector<16x128xf32>,
    } else {
    }
    %c0 = arith.constant 0 : index
    %c0_1 = arith.constant 0 : index
    %3 = vector.load %arg2[%c0, %c0_1] : memref<16x128xf32, #tpu.memory_space<vmem>>, vector<16x128xf32>
    %c0_2 = arith.constant 0 : index
    %c0_3 = arith.constant 0 : index
    %4 = vector.load %arg3[%c0_2, %c0_3] : memref<16x128xf32, #tpu.memory_space<vmem>>, vector<16x128xf32>
    %5 = arith.subf %3, %4 : vector<16x128xf32>
    %6 = arith.mulf %5, %5 : vector<16x128xf32>
    %7 = math.absf %5 : vector<16x128xf32>
    %c0_4 = arith.constant 0 : index
    %c0_5 = arith.constant 0 : index
    %8 = vector.load %arg5[%c0_4, %c0_5] : memref<16x128xf32, #tpu.memory_space<vmem>>, vector<16x128xf32>
    %9 = arith.addf %8, %6 : vector<16x128xf32>
    %c0_6 = arith.constant 0 : index
    %c0_7 = arith.constant 0 : index
    %10 = vector.load %arg5[%c0_6, %c0_7] : memref<16x128xf32, #tpu.memory_space<vmem>>, vector<16x128xf32>
    tpu.vector_store %arg5[%c0_6, %c0_7], %9 {strides = array<i32>} : memref<16x128xf32, #tpu.memory_space<vmem>>, vector<16x128xf32>,
    %c0_8 = arith.constant 0 : index
    %c0_9 = arith.constant 0 : index
    %11 = vector.load %arg6[%c0_8, %c0_9] : memref<16x128xf32, #tpu.memory_space<vmem>>, vector<16x128xf32>
    %12 = arith.addf %11, %7 : vector<16x128xf32>
    %c0_10 = arith.constant 0 : index
    %c0_11 = arith.constant 0 : index
    %13 = vector.load %arg6[%c0_10, %c0_11] : memref<16x128xf32, #tpu.memory_space<vmem>>, vector<16x128xf32>
    tpu.vector_store %arg6[%c0_10, %c0_11], %12 {strides = array<i32>} : memref<16x128xf32, #tpu.memory_space<vmem>>, vector<16x128xf32>,
    %c0_i32_12 = arith.constant 0 : i32
    %14 = arith.cmpi eq, %arg1, %c0_i32_12 : i32
    %15 = arith.extui %14 : i1 to i32
    %c0_i32_13 = arith.constant 0 : i32
    %16 = arith.cmpi ne, %15, %c0_i32_13 : i32
    scf.if %16 {
      %c0_14 = arith.constant 0 : index
      %c0_15 = arith.constant 0 : index
      %17 = vector.load %arg5[%c0_14, %c0_15] : memref<16x128xf32, #tpu.memory_space<vmem>>, vector<16x128xf32>
      %18 = vector.shape_cast %17 : vector<16x128xf32> to vector<1x16x128xf32>
      %cst = arith.constant dense<0.000000e+00> : vector<1xf32>
      %19 = vector.multi_reduction <add>, %18, %cst [1, 2] : vector<1x16x128xf32> to vector<1xf32>
      %20 = vector.shape_cast %19 : vector<1xf32> to vector<1x1x1xf32>
      %21 = vector.extract %20[0, 0, 0] : f32 from vector<1x1x1xf32>
      %22 = vector.broadcast %21 : f32 to vector<1x1xf32>
      %c0_16 = arith.constant 0 : index
      %c0_17 = arith.constant 0 : index
      %23 = vector.load %arg6[%c0_16, %c0_17] : memref<16x128xf32, #tpu.memory_space<vmem>>, vector<16x128xf32>
      %24 = vector.shape_cast %23 : vector<16x128xf32> to vector<1x16x128xf32>
      %cst_18 = arith.constant dense<0.000000e+00> : vector<1xf32>
      %25 = vector.multi_reduction <add>, %24, %cst_18 [1, 2] : vector<1x16x128xf32> to vector<1xf32>
      %26 = vector.shape_cast %25 : vector<1xf32> to vector<1x1x1xf32>
      %27 = vector.extract %26[0, 0, 0] : f32 from vector<1x1x1xf32>
      %28 = vector.broadcast %27 : f32 to vector<1x1xf32>
      %cst_19 = arith.constant 3.41796869E-4 : f32
      %29 = vector.broadcast %cst_19 : f32 to vector<1x1xf32>
      %30 = arith.mulf %29, %22 : vector<1x1xf32>
      %cst_20 = arith.constant 1.46484381E-4 : f32
      %31 = vector.broadcast %cst_20 : f32 to vector<1x1xf32>
      %32 = arith.mulf %31, %28 : vector<1x1xf32>
      %33 = arith.addf %30, %32 : vector<1x1xf32>
      %c0_21 = arith.constant 0 : index
      %c0_22 = arith.constant 0 : index
      %34 = vector.load %arg4[%c0_21, %c0_22] : memref<1x1xf32, #tpu.memory_space<vmem>>, vector<1x1xf32>
      tpu.vector_store %arg4[%c0_21, %c0_22], %33 {strides = array<i32>} : memref<1x1xf32, #tpu.memory_space<vmem>>, vector<1x1xf32>,
    } else {
    }
    return
  }
  func.func @transform_0(%arg0: i32, %arg1: i32) -> (i32, i32) {
    %c1_i32 = arith.constant 1 : i32
    %0 = arith.muli %arg0, %c1_i32 : i32
    %1 = arith.addi %0, %arg1 : i32
    %c0_i32 = arith.constant 0 : i32
    %2 = arith.minsi %1, %c0_i32 : i32
    %c0_i32_0 = arith.constant 0 : i32
    %c0_i32_1 = arith.constant 0 : i32
    return %2, %c0_i32_0 : i32, i32
  }
  func.func @transform_1(%arg0: i32, %arg1: i32) -> (i32, i32) {
    %c1_i32 = arith.constant 1 : i32
    %0 = arith.muli %arg0, %c1_i32 : i32
    %1 = arith.addi %0, %arg1 : i32
    %c0_i32 = arith.constant 0 : i32
    %2 = arith.minsi %1, %c0_i32 : i32
    %c0_i32_0 = arith.constant 0 : i32
    %c0_i32_1 = arith.constant 0 : i32
    return %2, %c0_i32_0 : i32, i32
  }
  func.func @transform_2(%arg0: i32, %arg1: i32) -> (i32, i32) {
    %c0_i32 = arith.constant 0 : i32
    %c0_i32_0 = arith.constant 0 : i32
    return %arg0, %c0_i32 : i32, i32
  }
}

</mosaic_0001>

<llo_original>
// kernel: tpu_custom_call.1
$region0: #{tpu_custom_call.1}
  #allocation0 [shape = 'u32[]', space=smem, size = 0x4, offset = 0x4, fixed_abs, tag = 'smem constant byte address 0x4 - core index']
  #allocation1 [shape = 'u32[144,128]{1,0:T(1,128)}', space=vmem, size = 0x12000, scoped, tag = 'internal scratch']
  #allocation2 [shape = 'f32[16,128]{1,0:T(8,128)}', space=vmem, size = 0x2000, scoped, tag = 'scratch operand']
  #allocation3 [shape = 'f32[16,128]{1,0:T(8,128)}', space=vmem, size = 0x2000, scoped, tag = 'scratch operand']
  %s0 = inlined_call_operand.hbm [shape: f32[16,128], index: 0, kind: input, shape index: {}]
  %s1 = inlined_call_operand.hbm [shape: f32[16,128], index: 1, kind: input, shape index: {}]
  %s2 = inlined_call_operand.hbm [shape: f32[1,1], index: 2, kind: output, shape index: {}]
  %s3 = sld [smem:[#allocation0]]
  $region34: #{tpu_custom_call.1} parent=0
    _
  %s5 = ssub.s32 1, %s3
  %s6 = scalar_select 0, %s5, %s3
  $region1: #{tpu_custom_call.1} parent=0
    #allocation4 [shape = 'u8[8192]{0}', space=vmem, size = 0x2000, scoped, tag = 'input window, operand 0, single buffered']
    #allocation5 [shape = 's32[1]{0}', space=sflag, size = 0x4, scoped, tag = 'scoped memory for tpu_custom_call.1']
    #allocation6 [shape = 's32[1]{0}', space=sflag, size = 0x4, scoped, tag = 'scoped memory for tpu_custom_call.1']
    #allocation7 [shape = 'u8[8192]{0}', space=vmem, size = 0x2000, scoped, tag = 'input window, operand 1, single buffered']
    #allocation8 [shape = 's32[1]{0}', space=sflag, size = 0x4, scoped, tag = 'scoped memory for tpu_custom_call.1']
    #allocation9 [shape = 'u8[512]{0}', space=vmem, size = 0x400, scoped, tag = 'output window, operand 0, single buffered']
    %7 = vsyncpa [#allocation5], 0
    %8 = vsyncpa [#allocation8], 0
    %9 = vsyncpa [#allocation6], 0
    // Predicated region
    $region2: #{tpu_custom_call.1} parent=1 // pred_check
      _
    $region3: #{tpu_custom_call.1} parent=1 // pred_check_branch
      %11 = sbr.rel (0) target = $region5
    $region4: #{tpu_custom_call.1} parent=1 // pred_region
      %s12 = sadd.s32 0, 0
      %p13 = scmp.lt.s32.totalorder %s12, 0
      %s14 = scalar_select %p13, %s12, 0
      %s15 = smul.u32 2, %s14
      %s17 = ssub.s32 256, 256
      %18 = vsyncadd [#allocation5], %s17
      %s19 = smul.addr %s15, 128
      %s20 = scalar_lea.hbm %s0, %s19
      %s21 = sshll.u32 [#allocation4], 4
      %s22 = int_to_ptr.vmem [resolvable:$true] %s21
      %27 = dma.hbm_to_vmem [thread:$0]  %s20, 256, %s22, [#allocation5], 128, 128, 8
    $region5: #{tpu_custom_call.1} parent=1 // pred_fallthru
      _
    // Predicated region
    $region6: #{tpu_custom_call.1} parent=1 // pred_check
      _
    $region7: #{tpu_custom_call.1} parent=1 // pred_check_branch
      %29 = sbr.rel (0) target = $region9
    $region8: #{tpu_custom_call.1} parent=1 // pred_region
      %s30 = sadd.s32 0, 0
      %p31 = scmp.lt.s32.totalorder %s30, 0
      %s32 = scalar_select %p31, %s30, 0
      %s33 = smul.u32 2, %s32
      %s35 = ssub.s32 256, 256
      %36 = vsyncadd [#allocation8], %s35
      %s37 = smul.addr %s33, 128
      %s38 = scalar_lea.hbm %s1, %s37
      %s39 = sshll.u32 [#allocation7], 4
      %s40 = int_to_ptr.vmem [resolvable:$true] %s39
      %45 = dma.hbm_to_vmem [thread:$0]  %s38, 256, %s40, [#allocation8], 128, 128, 8
    $region9: #{tpu_custom_call.1} parent=1 // pred_fallthru
      _
    // Predicated region
    $region10: #{tpu_custom_call.1} parent=1 // pred_check
      _
    $region11: #{tpu_custom_call.1} parent=1 // pred_check_branch
      %47 = sbr.rel (0) target = $region13
    $region12: #{tpu_custom_call.1} parent=1 // pred_region
      %48 = dma.done [#allocation5], 256
    $region13: #{tpu_custom_call.1} parent=1 // pred_fallthru
      _
    // Predicated region
    $region14: #{tpu_custom_call.1} parent=1 // pred_check
      _
    $region15: #{tpu_custom_call.1} parent=1 // pred_check_branch
      %50 = sbr.rel (0) target = $region17
    $region16: #{tpu_custom_call.1} parent=1 // pred_region
      %51 = dma.done [#allocation8], 256
    $region17: #{tpu_custom_call.1} parent=1 // pred_fallthru
      _
    %s52 = sadd.s32 0, 0
    %p53 = scmp.lt.s32.totalorder %s52, 0
    %s54 = scalar_select %p53, %s52, 0
    %s55 = smul.u32 2, %s54
    %s56 = sadd.s32 0, 0
    %p57 = scmp.lt.s32.totalorder %s56, 0
    %s58 = scalar_select %p57, %s56, 0
    %s59 = smul.u32 2, %s58
    %p60 = scmp.eq.s32.totalorder 0, 0
    // Predicated region
    $region18: #{tpu_custom_call.1} parent=1 // pred_check
      %p61 = pneg %p60
    $region19: #{tpu_custom_call.1} parent=1 // pred_check_branch
      %63 = sbr.rel (%p61) target = $region21
    $region20: #{tpu_custom_call.1} parent=1 // pred_region
      %64 = vst [vmem:[#allocation2] sm:$0xff] 0.0
      %65 = vst [vmem:[#allocation2 + $0x8] sm:$0xff] 0.0
      %66 = vst [vmem:[#allocation3] sm:$0xff] 0.0
      %67 = vst [vmem:[#allocation3 + $0x8] sm:$0xff] 0.0
    $region21: #{tpu_custom_call.1} parent=1 // pred_fallthru
      _
    %v68 = vld [vmem:[#allocation4] sm:$0xff]
    %v69 = vld [vmem:[#allocation4 + $0x8] sm:$0xff]
    %v70 = vld [vmem:[#allocation7] sm:$0xff]
    %v71 = vld [vmem:[#allocation7 + $0x8] sm:$0xff]
    %v72 = vsub.f32 %v68, %v70
    %v73 = vsub.f32 %v69, %v71
    %v74 = vmul.f32 %v72, %v72
    %v75 = vmul.f32 %v73, %v73
    %v76 = vand.u32 2147483647, %v72
    %v77 = vand.u32 2147483647, %v73
    %v78 = vld [vmem:[#allocation2] sm:$0xff]
    %v79 = vld [vmem:[#allocation2 + $0x8] sm:$0xff]
    %v80 = vadd.f32 %v78, %v74
    %v81 = vadd.f32 %v79, %v75
    %82 = vst [vmem:[#allocation2] sm:$0xff] %v80
    %83 = vst [vmem:[#allocation2 + $0x8] sm:$0xff] %v81
    %v84 = vld [vmem:[#allocation3] sm:$0xff]
    %v85 = vld [vmem:[#allocation3 + $0x8] sm:$0xff]
    %v86 = vadd.f32 %v84, %v76
    %v87 = vadd.f32 %v85, %v77
    %88 = vst [vmem:[#allocation3] sm:$0xff] %v86
    %89 = vst [vmem:[#allocation3 + $0x8] sm:$0xff] %v87
    // Predicated region
    $region22: #{tpu_custom_call.1} parent=1 // pred_check
      %p90 = pneg %p60
    $region23: #{tpu_custom_call.1} parent=1 // pred_check_branch
      %92 = sbr.rel (%p90) target = $region25
    $region24: #{tpu_custom_call.1} parent=1 // pred_region
      %v93 = vld [vmem:[#allocation2] sm:$0xff]
      %v94 = vld [vmem:[#allocation2 + $0x8] sm:$0xff]
      %v95 = vadd.f32 %v93, %v94
      %96 = vadd.xlane.f32.xlu0 %v95
      %v97 = vpop.xlane.xlu0 %96
      %v98 = vrot.slane %v97, 4
      %v99 = vadd.f32 %v97, %v98
      %v100 = vrot.slane %v99, 2
      %v101 = vadd.f32 %v99, %v100
      %v102 = vrot.slane %v101, 1
      %v103 = vadd.f32 %v101, %v102
      %s104 = vtos %v103
      %v105 = vstv %s104
      %v106 = vld [vmem:[#allocation3] sm:$0xff]
      %v107 = vld [vmem:[#allocation3 + $0x8] sm:$0xff]
      %v108 = vadd.f32 %v106, %v107
      %109 = vadd.xlane.f32.xlu0 %v108
      %v110 = vpop.xlane.xlu0 %109
      %v111 = vrot.slane %v110, 4
      %v112 = vadd.f32 %v110, %v111
      %v113 = vrot.slane %v112, 2
      %v114 = vadd.f32 %v112, %v113
      %v115 = vrot.slane %v114, 1
      %v116 = vadd.f32 %v114, %v115
      %s117 = vtos %v116
      %v118 = vstv %s117
      %v119 = vmul.f32 %v105, 0.00034179687
      %v120 = vmul.f32 %v118, 0.00014648438
      %v121 = vadd.f32 %v119, %v120
      %vm122 = vcmask 0
      %123 = vst.msk [vmem:[#allocation9] sm:$0x1] %vm122, %v121
    $region25: #{tpu_custom_call.1} parent=1 // pred_fallthru
      _
    // Predicated region
    $region26: #{tpu_custom_call.1} parent=1 // pred_check
      _
    $region27: #{tpu_custom_call.1} parent=1 // pred_check_branch
      %125 = sbr.rel (0) target = $region29
    $region28: #{tpu_custom_call.1} parent=1 // pred_region
      %s127 = ssub.s32 16, 16
      %128 = vsyncadd [#allocation6], %s127
      %s130 = sshll.u32 [#allocation9], 4
      %s131 = int_to_ptr.vmem [resolvable:$true] %s130
      %133 = dma.vmem_to_hbm [thread:$0]  %s131, 16, %s2, [#allocation6]
    $region29: #{tpu_custom_call.1} parent=1 // pred_fallthru
      _
    // Predicated region
    $region30: #{tpu_custom_call.1} parent=1 // pred_check
      _
    $region31: #{tpu_custom_call.1} parent=1 // pred_check_branch
      %135 = sbr.rel (0) target = $region33
    $region32: #{tpu_custom_call.1} parent=1 // pred_region
      %136 = dma.done [#allocation6], 16
    $region33: #{tpu_custom_call.1} parent=1 // pred_fallthru
      _
    %137 = vsyncpa [#allocation5], 1
    %138 = vsyncpa [#allocation8], 1
    %139 = vsyncpa [#allocation6], 1

</llo_original>
